<compile_context>
chip_gen: v7x
topology: tpu7x:2x2x1
jax: 0.10.0
libtpu: 0.0.40
codegen_flags: <defaults>
</compile_context>

<pallas_src>
import math
from functools import partial

import jax
import jax.numpy as jnp
from jax.experimental import pallas as pl
from jax.experimental.pallas import tpu as pltpu

COMPUTE_DTYPE = jnp.bfloat16   # HBM-path dtype (dots accumulate in f32)
SUBLANE = 16                   # bf16 sublane packing
OUT_PAD_MULT = 8               # pad fused output columns to a multiple of this


def _round_up(x, m):
    return (x + m - 1) // m * m


def _fused_mlp_kernel(x_ref, *refs, num_layers):
    """refs = (w_0..w_{L-1}, b_0..b_{L-1}, o_ref).

    Weights are the fused per-layer matrices (column-concat for layer 0,
    block-diagonal afterwards, final layer padded to OUT_PAD_MULT columns).
    Dots run on bf16 MXU inputs with f32 accumulation; bias/ReLU act on the
    f32 dot output (works on v5e which lacks bf16 VALU).
    """
    w_refs = refs[:num_layers]
    b_refs = refs[num_layers:2 * num_layers]
    o_ref = refs[2 * num_layers]

    h = x_ref[...]
    for i in range(num_layers):
        h = jnp.dot(h.astype(w_refs[i].dtype), w_refs[i][...],
                    preferred_element_type=jnp.float32)
        h = h + b_refs[i][...].astype(jnp.float32)   # (1, out) broadcast over rows
        if i < num_layers - 1:
            h = jnp.maximum(h, 0.0)                  # ReLU on hidden layers only
    o_ref[...] = h.astype(o_ref.dtype)


def _layer_sizes(num_layers, input_size, output_size):
    """Mirror Model._create_sequential_linear_relu_layers layer dims."""
    sizes = []
    this_in = input_size
    for _ in range(num_layers - 1):
        this_out = max(int(this_in / 2), output_size)
        sizes.append((this_in, this_out, True))    # Linear + ReLU
        this_in = this_out
    sizes.append((this_in, output_size, False))    # final Linear, no ReLU
    return sizes


def init_mlp_params(key, num_layers, input_size, output_size):
    """PyTorch nn.Linear-style init (uniform +-1/sqrt(fan_in)), kept in f32."""
    params = []
    for (fan_in, fan_out, _relu) in _layer_sizes(num_layers, input_size, output_size):
        key, kw, kb = jax.random.split(key, 3)
        bound = 1.0 / math.sqrt(fan_in)
        w = jax.random.uniform(kw, (fan_in, fan_out), jnp.float32, -bound, bound)
        b = jax.random.uniform(kb, (1, fan_out), jnp.float32, -bound, bound)
        params.append((w, b, _relu))
    return params, key


def build_fused_params(cas_params, att_params, dtype=COMPUTE_DTYPE,
                       out_pad_mult=OUT_PAD_MULT):
    """Fuse the two heads' per-layer weights into single matrices.

    Layer 0: column-concat (both heads consume the same features).
    Layers >0: block-diagonal (each head keeps its own hidden stream).
    Final layer: zero-padded to a multiple of `out_pad_mult` output columns.

    Call ONCE at init (hoisted out of the per-forward hot path) and reuse the
    returned arrays.  Also returns the nonzero weight-element count for an
    honest FLOP estimate.
    """
    num_layers = len(cas_params)
    fused_w, fused_b = [], []
    nnz_weight_elems = 0
    for i in range(num_layers):
        wc, bc, _ = cas_params[i]
        wa, ba, _ = att_params[i]
        nnz_weight_elems += wc.size + wa.size
        if i == 0:
            w = jnp.concatenate([wc, wa], axis=1)
        else:
            w = jnp.block([
                [wc, jnp.zeros((wc.shape[0], wa.shape[1]), wc.dtype)],
                [jnp.zeros((wa.shape[0], wc.shape[1]), wa.dtype), wa],
            ])
        b = jnp.concatenate([bc, ba], axis=1)
        if i == num_layers - 1:
            out_w = _round_up(w.shape[1], out_pad_mult)
            pad = out_w - w.shape[1]
            w = jnp.pad(w, ((0, 0), (0, pad)))
            b = jnp.pad(b, ((0, 0), (0, pad)))
        fused_w.append(w.astype(dtype))
        fused_b.append(b.astype(dtype))
    return fused_w, fused_b, nnz_weight_elems


def fused_model_forward(features, fused_w, fused_b, *, num_classes, att_dim,
                        nnz_weight_elems, tm_cap=2048, min_blocks=4):
    """Equivalent of Model.forward: returns (cas, attention) in one pallas_call.

    `fused_w` / `fused_b` must come from build_fused_params (already fused,
    already in the compute dtype) so no per-call weight shuffling happens.
    """
    num_layers = len(fused_w)
    T, F_in = features.shape
    out_w = fused_w[-1].shape[1]
    compute_dtype = fused_w[0].dtype

    if features.dtype != compute_dtype:
        features = features.astype(compute_dtype)

    # Row tile: multiple of 16 sublanes (bf16 packing), capped at tm_cap, and
    # clamped so the grid keeps >= min_blocks steps when T allows it (lets the
    # "parallel" row axis shard across both TensorCores on v7x).
    tm = min(tm_cap, _round_up(max(pl.cdiv(T, min_blocks), 1), SUBLANE))
    tm = max(tm, SUBLANE)
    T_pad = _round_up(T, tm)
    if T_pad != T:
        features = jnp.pad(features, ((0, T_pad - T), (0, 0)))
    grid = (T_pad // tm,)

    in_specs = [pl.BlockSpec((tm, F_in), lambda i: (i, 0))]          # streamed rows
    for w in fused_w:
        in_specs.append(pl.BlockSpec(w.shape, lambda i: (0, 0)))     # weights resident
    for b in fused_b:
        in_specs.append(pl.BlockSpec(b.shape, lambda i: (0, 0)))     # biases resident
    out_specs = pl.BlockSpec((tm, out_w), lambda i: (i, 0))          # narrow out slab

    itemsize = jnp.dtype(compute_dtype).itemsize
    flops = 2 * T_pad * nnz_weight_elems                 # zero blocks not counted
    bytes_accessed = (
        T_pad * F_in * itemsize
        + sum(int(w.size) for w in fused_w) * itemsize
        + sum(int(b.size) for b in fused_b) * itemsize
        + T_pad * out_w * itemsize
    )

    out = pl.pallas_call(
        partial(_fused_mlp_kernel, num_layers=num_layers),
        out_shape=jax.ShapeDtypeStruct((T_pad, out_w), compute_dtype),
        grid=grid,
        in_specs=in_specs,
        out_specs=out_specs,
        compiler_params=pltpu.CompilerParams(
            dimension_semantics=("parallel",),      # row tiles are independent
            vmem_limit_bytes=32 * 1024 * 1024,      # safe on v5e/v6e/v7x, >> need
        ),
        cost_estimate=pl.CostEstimate(
            flops=flops, transcendentals=0, bytes_accessed=bytes_accessed),
    )(features, *fused_w, *fused_b)

    # Narrow slab -> these slices are near-free; padded extra T rows (garbage
    # from biases through ReLU) are dropped here.
    cas = out[:T, :num_classes]
    attention = out[:T, num_classes:num_classes + att_dim]
    return cas, attention


# TODO(synk): Model.loss / smooth_attention_function are training-time,
# ragged per-video host-side logic (nll / cross-entropy over variable slices)
# and are not part of forward(); intentionally not implemented as Pallas.


if __name__ == "__main__":
    # Small, forward-consistent config
    num_classes = 4
    input_size = 32
    num_layers = 3
    pseudo_gt_loss_dim = 2
    T = 16  # number of frames / feature rows

    key = jax.random.PRNGKey(0)
    key, kx = jax.random.split(key)
    features = jax.random.normal(kx, (T, input_size), jnp.float32)

    cas_params, key = init_mlp_params(key, num_layers, input_size, num_classes)
    att_params, key = init_mlp_params(key, num_layers, input_size, pseudo_gt_loss_dim)

    # Hoisted: fuse the heads' weights ONCE at init (not per forward call).
    fused_w, fused_b, nnz = build_fused_params(cas_params, att_params)
    jax.block_until_ready((fused_w, fused_b))

    fwd = jax.jit(partial(fused_model_forward,
                          num_classes=num_classes,
                          att_dim=pseudo_gt_loss_dim,
                          nnz_weight_elems=nnz))

    cas, attention = fwd(features, fused_w, fused_b)
    jax.block_until_ready((cas, attention))

    # Reference check in plain JAX against the original (un-fused, f32) params.
    def ref_mlp(x, params):
        for (w, b, relu) in params:
            x = x @ w + b
            if relu:
                x = jnp.maximum(x, 0.0)
        return x

    ref_cas = ref_mlp(features, cas_params)
    ref_att = ref_mlp(features, att_params)
    assert cas.shape == (T, num_classes)
    assert attention.shape == (T, pseudo_gt_loss_dim)
    # bf16 HBM path -> loosened tolerance vs. the f32 reference.
    assert jnp.allclose(cas.astype(jnp.float32), ref_cas, atol=3e-2, rtol=3e-2)
    assert jnp.allclose(attention.astype(jnp.float32), ref_att, atol=3e-2, rtol=3e-2)

    print("KERNEL_OK")
</pallas_src>

<mosaic_0001>
module attributes {stable_mosaic.version = 11 : i64} {
  func.func @_fused_mlp_kernel(%arg0: i32, %arg1: memref<16x32xbf16, #tpu.memory_space<vmem>>, %arg2: memref<32x32xbf16, #tpu.memory_space<vmem>>, %arg3: memref<32x16xbf16, #tpu.memory_space<vmem>>, %arg4: memref<16x8xbf16, #tpu.memory_space<vmem>>, %arg5: memref<1x32xbf16, #tpu.memory_space<vmem>>, %arg6: memref<1x16xbf16, #tpu.memory_space<vmem>>, %arg7: memref<1x8xbf16, #tpu.memory_space<vmem>>, %arg8: memref<16x8xbf16, #tpu.memory_space<vmem>>) attributes {dimension_semantics = [#tpu.dimension_semantics<parallel>], iteration_bounds = array<i64: 1>, scalar_prefetch = 0 : i64, scratch_operands = 0 : i64, tpu.core_type = #tpu.core_type<tc>, window_params = [{transform_indices = @transform_0, window_bounds = array<i64: 16, 32>}, {pipeline_mode = #tpu.pipeline_mode<synchronous>, transform_indices = @transform_1, window_bounds = array<i64: 32, 32>}, {pipeline_mode = #tpu.pipeline_mode<synchronous>, transform_indices = @transform_2, window_bounds = array<i64: 32, 16>}, {pipeline_mode = #tpu.pipeline_mode<synchronous>, transform_indices = @transform_3, window_bounds = array<i64: 16, 8>}, {pipeline_mode = #tpu.pipeline_mode<synchronous>, transform_indices = @transform_4, window_bounds = array<i64: 1, 32>}, {pipeline_mode = #tpu.pipeline_mode<synchronous>, transform_indices = @transform_5, window_bounds = array<i64: 1, 16>}, {pipeline_mode = #tpu.pipeline_mode<synchronous>, transform_indices = @transform_6, window_bounds = array<i64: 1, 8>}, {transform_indices = @transform_7, window_bounds = array<i64: 16, 8>}]} {
    %c0 = arith.constant 0 : index
    %c0_0 = arith.constant 0 : index
    %0 = vector.load %arg1[%c0, %c0_0] : memref<16x32xbf16, #tpu.memory_space<vmem>>, vector<16x32xbf16>
    %c0_1 = arith.constant 0 : index
    %c0_2 = arith.constant 0 : index
    %1 = vector.load %arg2[%c0_1, %c0_2] : memref<32x32xbf16, #tpu.memory_space<vmem>>, vector<32x32xbf16>
    %cst = arith.constant dense<0.000000e+00> : vector<16x32xf32>
    %2 = tpu.matmul %0, %1, %cst {dimension_numbers = #tpu.dot_dimension_numbers<[1], [0], [0], [1], [0, 0, 1, 1], [], []>} : vector<16x32xbf16>, vector<32x32xbf16>, vector<16x32xf32> -> vector<16x32xf32>
    %c0_3 = arith.constant 0 : index
    %c0_4 = arith.constant 0 : index
    %3 = vector.load %arg5[%c0_3, %c0_4] : memref<1x32xbf16, #tpu.memory_space<vmem>>, vector<1x32xbf16>
    %4 = arith.extf %3 : vector<1x32xbf16> to vector<1x32xf32>
    %5 = vector.broadcast %4 : vector<1x32xf32> to vector<16x32xf32>
    %6 = arith.addf %2, %5 : vector<16x32xf32>
    %cst_5 = arith.constant 0.000000e+00 : f32
    %7 = vector.broadcast %cst_5 : f32 to vector<16x32xf32>
    %8 = arith.maximumf %6, %7 : vector<16x32xf32>
    %9 = arith.truncf %8 : vector<16x32xf32> to vector<16x32xbf16>
    %c0_6 = arith.constant 0 : index
    %c0_7 = arith.constant 0 : index
    %10 = vector.load %arg3[%c0_6, %c0_7] : memref<32x16xbf16, #tpu.memory_space<vmem>>, vector<32x16xbf16>
    %cst_8 = arith.constant dense<0.000000e+00> : vector<16x16xf32>
    %11 = tpu.matmul %9, %10, %cst_8 {dimension_numbers = #tpu.dot_dimension_numbers<[1], [0], [0], [1], [0, 0, 1, 1], [], []>} : vector<16x32xbf16>, vector<32x16xbf16>, vector<16x16xf32> -> vector<16x16xf32>
    %c0_9 = arith.constant 0 : index
    %c0_10 = arith.constant 0 : index
    %12 = vector.load %arg6[%c0_9, %c0_10] : memref<1x16xbf16, #tpu.memory_space<vmem>>, vector<1x16xbf16>
    %13 = arith.extf %12 : vector<1x16xbf16> to vector<1x16xf32>
    %14 = vector.broadcast %13 : vector<1x16xf32> to vector<16x16xf32>
    %15 = arith.addf %11, %14 : vector<16x16xf32>
    %cst_11 = arith.constant 0.000000e+00 : f32
    %16 = vector.broadcast %cst_11 : f32 to vector<16x16xf32>
    %17 = arith.maximumf %15, %16 : vector<16x16xf32>
    %18 = arith.truncf %17 : vector<16x16xf32> to vector<16x16xbf16>
    %c0_12 = arith.constant 0 : index
    %c0_13 = arith.constant 0 : index
    %19 = vector.load %arg4[%c0_12, %c0_13] : memref<16x8xbf16, #tpu.memory_space<vmem>>, vector<16x8xbf16>
    %cst_14 = arith.constant dense<0.000000e+00> : vector<16x8xf32>
    %20 = tpu.matmul %18, %19, %cst_14 {dimension_numbers = #tpu.dot_dimension_numbers<[1], [0], [0], [1], [0, 0, 1, 1], [], []>} : vector<16x16xbf16>, vector<16x8xbf16>, vector<16x8xf32> -> vector<16x8xf32>
    %c0_15 = arith.constant 0 : index
    %c0_16 = arith.constant 0 : index
    %21 = vector.load %arg7[%c0_15, %c0_16] : memref<1x8xbf16, #tpu.memory_space<vmem>>, vector<1x8xbf16>
    %22 = arith.extf %21 : vector<1x8xbf16> to vector<1x8xf32>
    %23 = vector.broadcast %22 : vector<1x8xf32> to vector<16x8xf32>
    %24 = arith.addf %20, %23 : vector<16x8xf32>
    %25 = arith.truncf %24 : vector<16x8xf32> to vector<16x8xbf16>
    %c0_17 = arith.constant 0 : index
    %c0_18 = arith.constant 0 : index
    %26 = vector.load %arg8[%c0_17, %c0_18] : memref<16x8xbf16, #tpu.memory_space<vmem>>, vector<16x8xbf16>
    tpu.vector_store %arg8[%c0_17, %c0_18], %25 {strides = array<i32>} : memref<16x8xbf16, #tpu.memory_space<vmem>>, vector<16x8xbf16>,
    return
  }
  func.func @transform_0(%arg0: i32) -> (i32, i32) {
    %c0_i32 = arith.constant 0 : i32
    %c0_i32_0 = arith.constant 0 : i32
    return %arg0, %c0_i32 : i32, i32
  }
  func.func @transform_1(%arg0: i32) -> (i32, i32) {
    %c0_i32 = arith.constant 0 : i32
    %c0_i32_0 = arith.constant 0 : i32
    %c0_i32_1 = arith.constant 0 : i32
    return %c0_i32, %c0_i32_0 : i32, i32
  }
  func.func @transform_2(%arg0: i32) -> (i32, i32) {
    %c0_i32 = arith.constant 0 : i32
    %c0_i32_0 = arith.constant 0 : i32
    %c0_i32_1 = arith.constant 0 : i32
    return %c0_i32, %c0_i32_0 : i32, i32
  }
  func.func @transform_3(%arg0: i32) -> (i32, i32) {
    %c0_i32 = arith.constant 0 : i32
    %c0_i32_0 = arith.constant 0 : i32
    %c0_i32_1 = arith.constant 0 : i32
    return %c0_i32, %c0_i32_0 : i32, i32
  }
  func.func @transform_4(%arg0: i32) -> (i32, i32) {
    %c0_i32 = arith.constant 0 : i32
    %c0_i32_0 = arith.constant 0 : i32
    %c0_i32_1 = arith.constant 0 : i32
    return %c0_i32, %c0_i32_0 : i32, i32
  }
  func.func @transform_5(%arg0: i32) -> (i32, i32) {
    %c0_i32 = arith.constant 0 : i32
    %c0_i32_0 = arith.constant 0 : i32
    %c0_i32_1 = arith.constant 0 : i32
    return %c0_i32, %c0_i32_0 : i32, i32
  }
  func.func @transform_6(%arg0: i32) -> (i32, i32) {
    %c0_i32 = arith.constant 0 : i32
    %c0_i32_0 = arith.constant 0 : i32
    %c0_i32_1 = arith.constant 0 : i32
    return %c0_i32, %c0_i32_0 : i32, i32
  }
  func.func @transform_7(%arg0: i32) -> (i32, i32) {
    %c0_i32 = arith.constant 0 : i32
    %c0_i32_0 = arith.constant 0 : i32
    return %arg0, %c0_i32 : i32, i32
  }
}

</mosaic_0001>

<llo_original>
// kernel: fused_model_forward.1
$region0: #{fused_model_forward.1}
  #allocation0 [shape = 'u32[]', space=smem, size = 0x4, offset = 0x4, fixed_abs, tag = 'smem constant byte address 0x4 - core index']
  #allocation1 [shape = 'u32[144,128]{1,0:T(1,128)}', space=vmem, size = 0x12000, scoped, tag = 'internal scratch']
  %s0 = inlined_call_operand.vmem [shape: bf16[16,32], index: 0, kind: input, shape index: {}]
  %s1 = inlined_call_operand.vmem [shape: bf16[32,32], index: 1, kind: input, shape index: {}]
  %s2 = inlined_call_operand.vmem [shape: bf16[32,16], index: 2, kind: input, shape index: {}]
  %s3 = inlined_call_operand.vmem [shape: bf16[16,8], index: 3, kind: input, shape index: {}]
  %s4 = inlined_call_operand.vmem [shape: bf16[1,32], index: 4, kind: input, shape index: {}]
  %s5 = inlined_call_operand.vmem [shape: bf16[1,16], index: 5, kind: input, shape index: {}]
  %s6 = inlined_call_operand.vmem [shape: bf16[1,8], index: 6, kind: input, shape index: {}]
  %s7 = inlined_call_operand.vmem [shape: bf16[16,8], index: 7, kind: output, shape index: {}]
  %s8 = sld [smem:[#allocation0]]
  $region38: #{fused_model_forward.1} parent=0
    _
  %s10 = ssub.s32 1, %s8
  %s11 = scalar_select 0, %s10, %s8
  // Predicated region
  $region2: #{fused_model_forward.1} parent=0 // pred_check
    _
  $region3: #{fused_model_forward.1} parent=0 // pred_check_branch
    %13 = sbr.rel (0) target = $region5
  $region4: #{fused_model_forward.1} parent=0 // pred_region
    _
  $region5: #{fused_model_forward.1} parent=0 // pred_fallthru
    _
  // Predicated region
  $region6: #{fused_model_forward.1} parent=0 // pred_check
    _
  $region7: #{fused_model_forward.1} parent=0 // pred_check_branch
    %15 = sbr.rel (0) target = $region9
  $region8: #{fused_model_forward.1} parent=0 // pred_region
    _
  $region9: #{fused_model_forward.1} parent=0 // pred_fallthru
    _
  // Predicated region
  $region10: #{fused_model_forward.1} parent=0 // pred_check
    _
  $region11: #{fused_model_forward.1} parent=0 // pred_check_branch
    %17 = sbr.rel (0) target = $region13
  $region12: #{fused_model_forward.1} parent=0 // pred_region
    _
  $region13: #{fused_model_forward.1} parent=0 // pred_fallthru
    _
  // Predicated region
  $region14: #{fused_model_forward.1} parent=0 // pred_check
    _
  $region15: #{fused_model_forward.1} parent=0 // pred_check_branch
    %19 = sbr.rel (0) target = $region17
  $region16: #{fused_model_forward.1} parent=0 // pred_region
    _
  $region17: #{fused_model_forward.1} parent=0 // pred_fallthru
    _
  // Predicated region
  $region18: #{fused_model_forward.1} parent=0 // pred_check
    _
  $region19: #{fused_model_forward.1} parent=0 // pred_check_branch
    %21 = sbr.rel (0) target = $region21
  $region20: #{fused_model_forward.1} parent=0 // pred_region
    _
  $region21: #{fused_model_forward.1} parent=0 // pred_fallthru
    _
  // Predicated region
  $region22: #{fused_model_forward.1} parent=0 // pred_check
    _
  $region23: #{fused_model_forward.1} parent=0 // pred_check_branch
    %23 = sbr.rel (0) target = $region25
  $region24: #{fused_model_forward.1} parent=0 // pred_region
    _
  $region25: #{fused_model_forward.1} parent=0 // pred_fallthru
    _
  // Predicated region
  $region26: #{fused_model_forward.1} parent=0 // pred_check
    _
  $region27: #{fused_model_forward.1} parent=0 // pred_check_branch
    %25 = sbr.rel (0) target = $region29
  $region28: #{fused_model_forward.1} parent=0 // pred_region
    _
  $region29: #{fused_model_forward.1} parent=0 // pred_fallthru
    _
  %v27 = vld [vmem:[%s0] sm:$0xf]
  %v28 = vld [vmem:[%s0 + $0x4] sm:$0xf]
  %v29 = vld [vmem:[%s1] sm:$0xf]
  %v30 = vld [vmem:[%s1 + $0x4] sm:$0xf]
  %v31 = vld [vmem:[%s1 + $0x8] sm:$0xf]
  %v32 = vld [vmem:[%s1 + $0xc] sm:$0xf]
  %v33 = vld [vmem:[%s4] sm:$0x1]
  %v34 = vunpack.c.l.bf16 %v33
  %v35 = vlaneseq
  %v36 = vshrl.u32 %v35, 7
  %v37 = vsub.s32 0, %v36
  %v38 = vrot.slane %v34, %v37
  %v41 = vunpack.c.l.b16 %v27
  %v42 = vunpack.c.l.b16 %v28
  %v43 = vpack.c.b16 %v42, %v41
  %v48 = vunpack.c.l.b16 %v29
  %v49 = vunpack.c.l.b16 %v30
  %v50 = vunpack.c.l.b16 %v31
  %v51 = vunpack.c.l.b16 %v32
  %v52 = vpack.c.b16 %v49, %v48
  %v53 = vpack.c.b16 %v51, %v50
  %vm56 = vcmask 261120
  %v58 = vsel %vm56, %v43, 0
  %60 = vmatprep.subr.bf16.mxu0 0
  %61 = vmatpush1.bf16.msra.mxu0 %v52
  %62 = vmatprep.subr.bf16.mxu0 0
  %63 = vmatpush1.bf16.msra.mxu0 %v53
  %64 = vmatprep.subr.bf16.mxu0 0
  %65 = vmatpush1.bf16.msra.mxu0 0
  %66 = vmatprep.subr.bf16.mxu0 0
  %67 = vmatpush1.bf16.msra.mxu0 0
  %68 = vmatprep.subr.bf16.mxu0 0
  %69 = vmatpush1.bf16.msra.mxu0 0
  %70 = vmatprep.subr.bf16.mxu0 0
  %71 = vmatpush1.bf16.msra.mxu0 0
  %72 = vmatprep.subr.bf16.mxu0 0
  %73 = vmatpush1.bf16.msra.mxu0 0
  %74 = vmatprep.subr.bf16.mxu0 0
  %75 = vmatpush1.bf16.msra.mxu0 0
  %76 = vmatprep.subr.bf16.mxu0 0
  %77 = vmatpush1.bf16.msra.mxu0 0
  %78 = vmatprep.subr.bf16.mxu0 0
  %79 = vmatpush1.bf16.msra.mxu0 0
  %80 = vmatprep.subr.bf16.mxu0 0
  %81 = vmatpush1.bf16.msra.mxu0 0
  %82 = vmatprep.subr.bf16.mxu0 0
  %83 = vmatpush1.bf16.msra.mxu0 0
  %84 = vmatprep.subr.bf16.mxu0 0
  %85 = vmatpush1.bf16.msra.mxu0 0
  %86 = vmatprep.subr.bf16.mxu0 0
  %87 = vmatpush1.bf16.msra.mxu0 0
  %88 = vmatprep.subr.bf16.mxu0 0
  %89 = vmatpush1.bf16.msra.mxu0 0
  %90 = vmatprep.subr.bf16.mxu0 0
  %91 = vmatpush1.bf16.msra.mxu0 0
  %92 = vmatprep.mubr.bf16.mxu0 0
  %93 = vmatmul.mubr.bf16.gmra.mrb[0].mxu0 %v58
  %v94 = vpop.f32.mrb[0].mxu0
  %v95 = vadd.f32 %v38, %v94
  %v96 = vpop.f32.mrb[0].mxu0
  %v97 = vpop.f32.mrb[0].mxu0
  %v98 = vadd.f32 %v38, %v97
  %v99 = vpop.f32.mrb[0].mxu0
  %100 = vdwg.mxu0
  %v101 = vmax.f32 %v95, 0.0
  %v102 = vmax.f32 %v98, 0.0
  %v103 = vpack.c.bf16 %v102, %v101
  %v104 = vld [vmem:[%s2] sm:$0xf]
  %v105 = vld [vmem:[%s2 + $0x4] sm:$0xf]
  %v106 = vld [vmem:[%s2 + $0x8] sm:$0xf]
  %v107 = vld [vmem:[%s2 + $0xc] sm:$0xf]
  %v108 = vld [vmem:[%s5] sm:$0x1]
  %v109 = vunpack.c.l.bf16 %v108
  %v110 = vlaneseq
  %v111 = vshrl.u32 %v110, 7
  %v112 = vsub.s32 0, %v111
  %v113 = vrot.slane %v109, %v112
  %v118 = vunpack.c.l.b16 %v104
  %v119 = vunpack.c.l.b16 %v105
  %v120 = vunpack.c.l.b16 %v106
  %v121 = vunpack.c.l.b16 %v107
  %v122 = vpack.c.b16 %v119, %v118
  %v123 = vpack.c.b16 %v121, %v120
  %v127 = vsel %vm56, %v103, 0
  %129 = vmatprep.subr.bf16.mxu0 0
  %130 = vmatpush1.bf16.msra.mxu0 %v122
  %131 = vmatprep.subr.bf16.mxu0 0
  %132 = vmatpush1.bf16.msra.mxu0 %v123
  %133 = vmatprep.subr.bf16.mxu0 0
  %134 = vmatpush1.bf16.msra.mxu0 0
  %135 = vmatprep.subr.bf16.mxu0 0
  %136 = vmatpush1.bf16.msra.mxu0 0
  %137 = vmatprep.subr.bf16.mxu0 0
  %138 = vmatpush1.bf16.msra.mxu0 0
  %139 = vmatprep.subr.bf16.mxu0 0
  %140 = vmatpush1.bf16.msra.mxu0 0
  %141 = vmatprep.subr.bf16.mxu0 0
  %142 = vmatpush1.bf16.msra.mxu0 0
  %143 = vmatprep.subr.bf16.mxu0 0
  %144 = vmatpush1.bf16.msra.mxu0 0
  %145 = vmatprep.subr.bf16.mxu0 0
  %146 = vmatpush1.bf16.msra.mxu0 0
  %147 = vmatprep.subr.bf16.mxu0 0
  %148 = vmatpush1.bf16.msra.mxu0 0
  %149 = vmatprep.subr.bf16.mxu0 0
  %150 = vmatpush1.bf16.msra.mxu0 0
  %151 = vmatprep.subr.bf16.mxu0 0
  %152 = vmatpush1.bf16.msra.mxu0 0
  %153 = vmatprep.subr.bf16.mxu0 0
  %154 = vmatpush1.bf16.msra.mxu0 0
  %155 = vmatprep.subr.bf16.mxu0 0
  %156 = vmatpush1.bf16.msra.mxu0 0
  %157 = vmatprep.subr.bf16.mxu0 0
  %158 = vmatpush1.bf16.msra.mxu0 0
  %159 = vmatprep.subr.bf16.mxu0 0
  %160 = vmatpush1.bf16.msra.mxu0 0
  %161 = vmatprep.mubr.bf16.mxu0 0
  %162 = vmatmul.mubr.bf16.gmra.mrb[0].mxu0 %v127
  %v163 = vpop.f32.mrb[0].mxu0
  %v164 = vadd.f32 %v113, %v163
  %v165 = vpop.f32.mrb[0].mxu0
  %v166 = vpop.f32.mrb[0].mxu0
  %v167 = vadd.f32 %v113, %v166
  %v168 = vpop.f32.mrb[0].mxu0
  %169 = vdwg.mxu0
  %v170 = vmax.f32 %v164, 0.0
  %v171 = vmax.f32 %v167, 0.0
  %v172 = vpack.c.bf16 %v171, %v170
  %v173 = vld [vmem:[%s3] sm:$0xf]
  %v174 = vld [vmem:[%s3 + $0x4] sm:$0xf]
  %v175 = vld [vmem:[%s6] sm:$0x1]
  %v176 = vunpack.c.l.bf16 %v175
  %v177 = vlaneseq
  %v178 = vshrl.u32 %v177, 7
  %v179 = vsub.s32 0, %v178
  %v180 = vrot.slane %v176, %v179
  %v183 = vunpack.c.l.b16 %v173
  %v184 = vunpack.c.l.b16 %v174
  %v185 = vpack.c.b16 %v184, %v183
  %vm187 = vcmask 130048
  %v189 = vsel %vm187, %v172, 0
  %191 = vmatprep.subr.bf16.mxu0 0
  %192 = vmatpush1.bf16.msra.mxu0 %v185
  %193 = vmatprep.subr.bf16.mxu0 0
  %194 = vmatpush1.bf16.msra.mxu0 0
  %195 = vmatprep.subr.bf16.mxu0 0
  %196 = vmatpush1.bf16.msra.mxu0 0
  %197 = vmatprep.subr.bf16.mxu0 0
  %198 = vmatpush1.bf16.msra.mxu0 0
  %199 = vmatprep.subr.bf16.mxu0 0
  %200 = vmatpush1.bf16.msra.mxu0 0
  %201 = vmatprep.subr.bf16.mxu0 0
  %202 = vmatpush1.bf16.msra.mxu0 0
  %203 = vmatprep.subr.bf16.mxu0 0
  %204 = vmatpush1.bf16.msra.mxu0 0
  %205 = vmatprep.subr.bf16.mxu0 0
  %206 = vmatpush1.bf16.msra.mxu0 0
  %207 = vmatprep.subr.bf16.mxu0 0
  %208 = vmatpush1.bf16.msra.mxu0 0
  %209 = vmatprep.subr.bf16.mxu0 0
  %210 = vmatpush1.bf16.msra.mxu0 0
  %211 = vmatprep.subr.bf16.mxu0 0
  %212 = vmatpush1.bf16.msra.mxu0 0
  %213 = vmatprep.subr.bf16.mxu0 0
  %214 = vmatpush1.bf16.msra.mxu0 0
  %215 = vmatprep.subr.bf16.mxu0 0
  %216 = vmatpush1.bf16.msra.mxu0 0
  %217 = vmatprep.subr.bf16.mxu0 0
  %218 = vmatpush1.bf16.msra.mxu0 0
  %219 = vmatprep.subr.bf16.mxu0 0
  %220 = vmatpush1.bf16.msra.mxu0 0
  %221 = vmatprep.subr.bf16.mxu0 0
  %222 = vmatpush1.bf16.msra.mxu0 0
  %223 = vmatprep.mubr.bf16.mxu0 0
  %224 = vmatmul.mubr.bf16.gmra.mrb[0].mxu0 %v189
  %v225 = vpop.f32.mrb[0].mxu0
  %v226 = vadd.f32 %v180, %v225
  %v227 = vpop.f32.mrb[0].mxu0
  %v228 = vpop.f32.mrb[0].mxu0
  %v229 = vadd.f32 %v180, %v228
  %v230 = vpop.f32.mrb[0].mxu0
  %231 = vdwg.mxu0
  %v232 = vpack.c.bf16 %v229, %v226
  %v234 = vunpack.c.l.b16 %v232
  %v235 = vunpack.c.h.b16 %v232
  %v236 = vpack.c.b16 %v234, %v234
  %v237 = vpack.c.b16 %v235, %v235
  %vm240 = vcmask 60416
  %241 = vst.msk [vmem:[%s7] sm:$0xf] %vm240, %v236
  %242 = vst.msk [vmem:[%s7 + $0x4] sm:$0xf] %vm240, %v237
  // Predicated region
  $region30: #{fused_model_forward.1} parent=0 // pred_check
    _
  $region31: #{fused_model_forward.1} parent=0 // pred_check_branch
    %244 = sbr.rel (0) target = $region33
  $region32: #{fused_model_forward.1} parent=0 // pred_region
    _
  $region33: #{fused_model_forward.1} parent=0 // pred_fallthru
    _
  // Predicated region
  $region34: #{fused_model_forward.1} parent=0 // pred_check
    _
  $region35: #{fused_model_forward.1} parent=0 // pred_check_branch
    %246 = sbr.rel (0) target = $region37
  $region36: #{fused_model_forward.1} parent=0 // pred_region
    _
  $region37: #{fused_model_forward.1} parent=0 // pred_fallthru
    _

</llo_original>
